<compile_context>
chip_gen: v7x
topology: tpu7x:2x2x1
jax: 0.10.0
libtpu: 0.0.40
codegen_flags: <defaults>
</compile_context>

<pallas_src>
import jax
import jax.numpy as jnp
import numpy as np
from jax import lax
from jax.experimental import pallas as pl
from jax.experimental.pallas import tpu as pltpu


def _make_conv_kernel(N, C, OC, KH, KW, OH, OW):
    """Direct (valid, stride-1) conv kernel, fully unrolled VPU multiply-accumulate."""

    def kernel(x_ref, w_ref, b_ref, o_ref):
        # x_ref: (N, C, H, W)        f32 in VMEM (single tile for this problem size)
        # w_ref: (OC*C*KH*KW,)       f32 in SMEM (scalar reads)
        # b_ref: (OC,)               f32 in SMEM (scalar reads)
        # o_ref: (N, OC*OH, OW)      f32 in VMEM -> one store per image, channels stacked
        for n in range(N):
            # --- Hoisted: load each input channel once and build its 9 shifted
            #     windows once; both output channels reuse them. ---
            wins = []
            for c in range(C):
                xc = x_ref[n, c, :, :]  # (H, W)
                wins.append(
                    [[xc[kh:kh + OH, kw:kw + OW] for kw in range(KW)] for kh in range(KH)]
                )

            # --- MAC chains (bias folded into accumulator init). ---
            accs = []
            for oc in range(OC):
                acc = jnp.full((OH, OW), b_ref[oc], jnp.float32)
                for c in range(C):
                    for kh in range(KH):
                        for kw in range(KW):
                            widx = ((oc * C + c) * KH + kh) * KW + kw
                            acc = acc + w_ref[widx] * wins[c][kh][kw]
                accs.append(acc)

            # --- Single merged store per image: (OC*OH, OW) slab. ---
            o_ref[n, :, :] = jnp.concatenate(accs, axis=0)

    return kernel


def conv2d_pallas(x, w_flat, b, *, out_channels, kh, kw):
    """Valid (padding=0), stride=1 conv2d done entirely inside one Pallas kernel.

    x:      (N, C, H, W) float32
    w_flat: (OC*C*KH*KW,) float32  (OIHW weight, pre-flattened once at init)
    b:      (OC,) float32
    returns (N, OC, OH, OW) float32
    """
    N, C, H, W = x.shape
    OH, OW = H - kh + 1, W - kw + 1
    kernel = _make_conv_kernel(N, C, out_channels, kh, kw, OH, OW)

    out = pl.pallas_call(
        kernel,
        # Kernel writes a channel-stacked slab -> one vst per image.
        out_shape=jax.ShapeDtypeStruct((N, out_channels * OH, OW), jnp.float32),
        in_specs=[
            pl.BlockSpec(memory_space=pltpu.MemorySpace.VMEM),   # x: whole array in VMEM
            pl.BlockSpec(memory_space=pltpu.MemorySpace.SMEM),   # weights: scalars in SMEM
            pl.BlockSpec(memory_space=pltpu.MemorySpace.SMEM),   # bias: scalars in SMEM
        ],
        out_specs=pl.BlockSpec(memory_space=pltpu.MemorySpace.VMEM),
    )(x, w_flat, b)

    # Metadata-only reshape back to NCHW.
    # TODO(synk): if N ever grows, switch to a batch-on-lanes layout ((C,H,W,N) in /
    # (OC,OH,OW,N) out) with a "parallel" grid over batch tiles instead of this
    # single-tile, fully unrolled kernel.
    return out.reshape(N, out_channels, OH, OW)


class TT:
    """JAX/Pallas port of the PyTorch TT module: Conv2d(1, 2, kernel_size=3, stride=1, padding=0)."""

    def __init__(self, key):
        kw_key, kb_key = jax.random.split(key)
        fan_in = 1 * 3 * 3
        bound = 1.0 / np.sqrt(fan_in)
        # Deterministic uniform init (same bound convention as torch's default); not a checkpoint load.
        self.weight = jax.random.uniform(kw_key, (2, 1, 3, 3), jnp.float32, minval=-bound, maxval=bound)
        self.bias = jax.random.uniform(kb_key, (2,), jnp.float32, minval=-bound, maxval=bound)
        # Flatten once at init so the per-call wrapper issues no XLA prep ops.
        self.w_flat = self.weight.reshape(-1)

    def __call__(self, x):
        return conv2d_pallas(x, self.w_flat, self.bias, out_channels=2, kh=3, kw=3)


if __name__ == "__main__":
    key = jax.random.PRNGKey(0)
    k_in, k_mod = jax.random.split(key)

    # Matches the reference script: input reshaped to [1, 1, 5, 5] (NCHW).
    x = jax.random.normal(k_in, (1, 1, 5, 5), jnp.float32)

    model = TT(k_mod)
    out = model(x)
    out = jax.block_until_ready(out)
    assert out.shape == (1, 2, 3, 3), out.shape

    # Cross-check against XLA's conv to validate semantics.
    ref = lax.conv_general_dilated(
        x, model.weight, window_strides=(1, 1), padding="VALID",
        dimension_numbers=("NCHW", "OIHW", "NCHW"),
    ) + model.bias.reshape(1, 2, 1, 1)
    np.testing.assert_allclose(np.asarray(out), np.asarray(ref), rtol=1e-5, atol=1e-5)

    print("KERNEL_OK")
</pallas_src>

<mosaic_0001>
module attributes {stable_mosaic.version = 11 : i64} {
  func.func @kernel(%arg0: memref<1x1x5x5xf32, #tpu.memory_space<vmem>>, %arg1: memref<18xf32, #tpu.memory_space<smem>>, %arg2: memref<2xf32, #tpu.memory_space<smem>>, %arg3: memref<1x6x3xf32, #tpu.memory_space<vmem>>) attributes {dimension_semantics = [], scalar_prefetch = 0 : i64, scratch_operands = 0 : i64, tpu.core_type = #tpu.core_type<tc>} {
    %c0 = arith.constant 0 : index
    %c0_0 = arith.constant 0 : index
    %c0_1 = arith.constant 0 : index
    %c0_2 = arith.constant 0 : index
    %0 = vector.load %arg0[%c0, %c0_0, %c0_1, %c0_2] : memref<1x1x5x5xf32, #tpu.memory_space<vmem>>, vector<1x1x5x5xf32>
    %1 = vector.shape_cast %0 : vector<1x1x5x5xf32> to vector<5x5xf32>
    %2 = vector.extract_strided_slice %1 {offsets = [0, 0], sizes = [3, 3], strides = [1, 1]} : vector<5x5xf32> to vector<3x3xf32>
    %3 = vector.extract_strided_slice %1 {offsets = [0, 1], sizes = [3, 3], strides = [1, 1]} : vector<5x5xf32> to vector<3x3xf32>
    %4 = vector.extract_strided_slice %1 {offsets = [0, 2], sizes = [3, 3], strides = [1, 1]} : vector<5x5xf32> to vector<3x3xf32>
    %5 = vector.extract_strided_slice %1 {offsets = [1, 0], sizes = [3, 3], strides = [1, 1]} : vector<5x5xf32> to vector<3x3xf32>
    %6 = vector.extract_strided_slice %1 {offsets = [1, 1], sizes = [3, 3], strides = [1, 1]} : vector<5x5xf32> to vector<3x3xf32>
    %7 = vector.extract_strided_slice %1 {offsets = [1, 2], sizes = [3, 3], strides = [1, 1]} : vector<5x5xf32> to vector<3x3xf32>
    %8 = vector.extract_strided_slice %1 {offsets = [2, 0], sizes = [3, 3], strides = [1, 1]} : vector<5x5xf32> to vector<3x3xf32>
    %9 = vector.extract_strided_slice %1 {offsets = [2, 1], sizes = [3, 3], strides = [1, 1]} : vector<5x5xf32> to vector<3x3xf32>
    %10 = vector.extract_strided_slice %1 {offsets = [2, 2], sizes = [3, 3], strides = [1, 1]} : vector<5x5xf32> to vector<3x3xf32>
    %c0_3 = arith.constant 0 : index
    %11 = memref.load %arg2[%c0_3] : memref<2xf32, #tpu.memory_space<smem>>
    %12 = vector.broadcast %11 : f32 to vector<3x3xf32>
    %c0_4 = arith.constant 0 : index
    %13 = memref.load %arg1[%c0_4] : memref<18xf32, #tpu.memory_space<smem>>
    %14 = vector.broadcast %13 : f32 to vector<3x3xf32>
    %15 = arith.mulf %14, %2 : vector<3x3xf32>
    %16 = arith.addf %12, %15 : vector<3x3xf32>
    %c1 = arith.constant 1 : index
    %17 = memref.load %arg1[%c1] : memref<18xf32, #tpu.memory_space<smem>>
    %18 = vector.broadcast %17 : f32 to vector<3x3xf32>
    %19 = arith.mulf %18, %3 : vector<3x3xf32>
    %20 = arith.addf %16, %19 : vector<3x3xf32>
    %c2 = arith.constant 2 : index
    %21 = memref.load %arg1[%c2] : memref<18xf32, #tpu.memory_space<smem>>
    %22 = vector.broadcast %21 : f32 to vector<3x3xf32>
    %23 = arith.mulf %22, %4 : vector<3x3xf32>
    %24 = arith.addf %20, %23 : vector<3x3xf32>
    %c3 = arith.constant 3 : index
    %25 = memref.load %arg1[%c3] : memref<18xf32, #tpu.memory_space<smem>>
    %26 = vector.broadcast %25 : f32 to vector<3x3xf32>
    %27 = arith.mulf %26, %5 : vector<3x3xf32>
    %28 = arith.addf %24, %27 : vector<3x3xf32>
    %c4 = arith.constant 4 : index
    %29 = memref.load %arg1[%c4] : memref<18xf32, #tpu.memory_space<smem>>
    %30 = vector.broadcast %29 : f32 to vector<3x3xf32>
    %31 = arith.mulf %30, %6 : vector<3x3xf32>
    %32 = arith.addf %28, %31 : vector<3x3xf32>
    %c5 = arith.constant 5 : index
    %33 = memref.load %arg1[%c5] : memref<18xf32, #tpu.memory_space<smem>>
    %34 = vector.broadcast %33 : f32 to vector<3x3xf32>
    %35 = arith.mulf %34, %7 : vector<3x3xf32>
    %36 = arith.addf %32, %35 : vector<3x3xf32>
    %c6 = arith.constant 6 : index
    %37 = memref.load %arg1[%c6] : memref<18xf32, #tpu.memory_space<smem>>
    %38 = vector.broadcast %37 : f32 to vector<3x3xf32>
    %39 = arith.mulf %38, %8 : vector<3x3xf32>
    %40 = arith.addf %36, %39 : vector<3x3xf32>
    %c7 = arith.constant 7 : index
    %41 = memref.load %arg1[%c7] : memref<18xf32, #tpu.memory_space<smem>>
    %42 = vector.broadcast %41 : f32 to vector<3x3xf32>
    %43 = arith.mulf %42, %9 : vector<3x3xf32>
    %44 = arith.addf %40, %43 : vector<3x3xf32>
    %c8 = arith.constant 8 : index
    %45 = memref.load %arg1[%c8] : memref<18xf32, #tpu.memory_space<smem>>
    %46 = vector.broadcast %45 : f32 to vector<3x3xf32>
    %47 = arith.mulf %46, %10 : vector<3x3xf32>
    %48 = arith.addf %44, %47 : vector<3x3xf32>
    %c1_5 = arith.constant 1 : index
    %49 = memref.load %arg2[%c1_5] : memref<2xf32, #tpu.memory_space<smem>>
    %50 = vector.broadcast %49 : f32 to vector<3x3xf32>
    %c9 = arith.constant 9 : index
    %51 = memref.load %arg1[%c9] : memref<18xf32, #tpu.memory_space<smem>>
    %52 = vector.broadcast %51 : f32 to vector<3x3xf32>
    %53 = arith.mulf %52, %2 : vector<3x3xf32>
    %54 = arith.addf %50, %53 : vector<3x3xf32>
    %c10 = arith.constant 10 : index
    %55 = memref.load %arg1[%c10] : memref<18xf32, #tpu.memory_space<smem>>
    %56 = vector.broadcast %55 : f32 to vector<3x3xf32>
    %57 = arith.mulf %56, %3 : vector<3x3xf32>
    %58 = arith.addf %54, %57 : vector<3x3xf32>
    %c11 = arith.constant 11 : index
    %59 = memref.load %arg1[%c11] : memref<18xf32, #tpu.memory_space<smem>>
    %60 = vector.broadcast %59 : f32 to vector<3x3xf32>
    %61 = arith.mulf %60, %4 : vector<3x3xf32>
    %62 = arith.addf %58, %61 : vector<3x3xf32>
    %c12 = arith.constant 12 : index
    %63 = memref.load %arg1[%c12] : memref<18xf32, #tpu.memory_space<smem>>
    %64 = vector.broadcast %63 : f32 to vector<3x3xf32>
    %65 = arith.mulf %64, %5 : vector<3x3xf32>
    %66 = arith.addf %62, %65 : vector<3x3xf32>
    %c13 = arith.constant 13 : index
    %67 = memref.load %arg1[%c13] : memref<18xf32, #tpu.memory_space<smem>>
    %68 = vector.broadcast %67 : f32 to vector<3x3xf32>
    %69 = arith.mulf %68, %6 : vector<3x3xf32>
    %70 = arith.addf %66, %69 : vector<3x3xf32>
    %c14 = arith.constant 14 : index
    %71 = memref.load %arg1[%c14] : memref<18xf32, #tpu.memory_space<smem>>
    %72 = vector.broadcast %71 : f32 to vector<3x3xf32>
    %73 = arith.mulf %72, %7 : vector<3x3xf32>
    %74 = arith.addf %70, %73 : vector<3x3xf32>
    %c15 = arith.constant 15 : index
    %75 = memref.load %arg1[%c15] : memref<18xf32, #tpu.memory_space<smem>>
    %76 = vector.broadcast %75 : f32 to vector<3x3xf32>
    %77 = arith.mulf %76, %8 : vector<3x3xf32>
    %78 = arith.addf %74, %77 : vector<3x3xf32>
    %c16 = arith.constant 16 : index
    %79 = memref.load %arg1[%c16] : memref<18xf32, #tpu.memory_space<smem>>
    %80 = vector.broadcast %79 : f32 to vector<3x3xf32>
    %81 = arith.mulf %80, %9 : vector<3x3xf32>
    %82 = arith.addf %78, %81 : vector<3x3xf32>
    %c17 = arith.constant 17 : index
    %83 = memref.load %arg1[%c17] : memref<18xf32, #tpu.memory_space<smem>>
    %84 = vector.broadcast %83 : f32 to vector<3x3xf32>
    %85 = arith.mulf %84, %10 : vector<3x3xf32>
    %86 = arith.addf %82, %85 : vector<3x3xf32>
    %87 = tpu.concatenate %48, %86 in 0 : vector<3x3xf32>, vector<3x3xf32> -> vector<6x3xf32>
    %c0_6 = arith.constant 0 : index
    %c0_7 = arith.constant 0 : index
    %c0_8 = arith.constant 0 : index
    %88 = vector.load %arg3[%c0_6, %c0_7, %c0_8] : memref<1x6x3xf32, #tpu.memory_space<vmem>>, vector<1x6x3xf32>
    %89 = vector.shape_cast %88 : vector<1x6x3xf32> to vector<6x3xf32>
    %90 = vector.shape_cast %87 : vector<6x3xf32> to vector<1x6x3xf32>
    tpu.vector_store %arg3[%c0_6, %c0_7, %c0_8], %90 {strides = array<i32>} : memref<1x6x3xf32, #tpu.memory_space<vmem>>, vector<1x6x3xf32>,
    return
  }
}

</mosaic_0001>

<llo_original>
// kernel: tpu_custom_call.1
$region0: #{tpu_custom_call.1}
  #allocation0 [shape = 'u32[]', space=smem, size = 0x4, offset = 0x4, fixed_abs, tag = 'smem constant byte address 0x4 - core index']
  #allocation1 [shape = 'u32[144,128]{1,0:T(1,128)}', space=vmem, size = 0x12000, scoped, tag = 'internal scratch']
  %s0 = inlined_call_operand.vmem [shape: f32[1,1,5,5], index: 0, kind: input, shape index: {}]
  %s1 = inlined_call_operand.vmem [shape: f32[18], index: 1, kind: input, shape index: {}]
  %s2 = inlined_call_operand.vmem [shape: f32[2], index: 2, kind: input, shape index: {}]
  %s3 = inlined_call_operand.vmem [shape: f32[1,6,3], index: 3, kind: output, shape index: {}]
  %s4 = sld [smem:[#allocation0]]
  $region30: #{tpu_custom_call.1} parent=0
    _
  %s6 = ssub.s32 1, %s4
  %s7 = scalar_select 0, %s6, %s4
  $region1: #{tpu_custom_call.1} parent=0
    #allocation2 [shape = 'u8[512]{0}', space=smem, size = 0x200, scoped, tag = 'input window, operand 1, single buffered']
    #allocation3 [shape = 's32[1]{0}', space=sflag, size = 0x4, scoped, tag = 'scoped memory for tpu_custom_call.1']
    #allocation4 [shape = 'u8[512]{0}', space=smem, size = 0x200, scoped, tag = 'input window, operand 2, single buffered']
    #allocation5 [shape = 's32[1]{0}', space=sflag, size = 0x4, scoped, tag = 'scoped memory for tpu_custom_call.1']
    %8 = vsyncpa [#allocation3], 0
    %9 = vsyncpa [#allocation5], 0
    // Predicated region
    $region2: #{tpu_custom_call.1} parent=1 // pred_check
      _
    $region3: #{tpu_custom_call.1} parent=1 // pred_check_branch
      %11 = sbr.rel (0) target = $region5
    $region4: #{tpu_custom_call.1} parent=1 // pred_region
      _
    $region5: #{tpu_custom_call.1} parent=1 // pred_fallthru
      _
    // Predicated region
    $region6: #{tpu_custom_call.1} parent=1 // pred_check
      _
    $region7: #{tpu_custom_call.1} parent=1 // pred_check_branch
      %13 = sbr.rel (0) target = $region9
    $region8: #{tpu_custom_call.1} parent=1 // pred_region
      %s15 = ssub.s32 16, 16
      %16 = vsyncadd [#allocation3], %s15
      %s18 = sshll.u32 %s1, 4
      %s19 = int_to_ptr.vmem [resolvable:$true] %s18
      %21 = dma.vmem_to_smem %s19, 16, [#allocation2], [#allocation3]
    $region9: #{tpu_custom_call.1} parent=1 // pred_fallthru
      _
    // Predicated region
    $region10: #{tpu_custom_call.1} parent=1 // pred_check
      _
    $region11: #{tpu_custom_call.1} parent=1 // pred_check_branch
      %23 = sbr.rel (0) target = $region13
    $region12: #{tpu_custom_call.1} parent=1 // pred_region
      %s25 = ssub.s32 16, 16
      %26 = vsyncadd [#allocation5], %s25
      %s28 = sshll.u32 %s2, 4
      %s29 = int_to_ptr.vmem [resolvable:$true] %s28
      %31 = dma.vmem_to_smem %s29, 16, [#allocation4], [#allocation5]
    $region13: #{tpu_custom_call.1} parent=1 // pred_fallthru
      _
    // Predicated region
    $region14: #{tpu_custom_call.1} parent=1 // pred_check
      _
    $region15: #{tpu_custom_call.1} parent=1 // pred_check_branch
      %33 = sbr.rel (0) target = $region17
    $region16: #{tpu_custom_call.1} parent=1 // pred_region
      %34 = dma.done [#allocation3], 16
    $region17: #{tpu_custom_call.1} parent=1 // pred_fallthru
      _
    // Predicated region
    $region18: #{tpu_custom_call.1} parent=1 // pred_check
      _
    $region19: #{tpu_custom_call.1} parent=1 // pred_check_branch
      %36 = sbr.rel (0) target = $region21
    $region20: #{tpu_custom_call.1} parent=1 // pred_region
      %37 = dma.done [#allocation5], 16
    $region21: #{tpu_custom_call.1} parent=1 // pred_fallthru
      _
    %38 = sfence
    %v39 = vld [vmem:[%s0] sm:$0x1f]
    %s40 = sld [smem:[#allocation4]]
    %v41 = vstv %s40
    %s42 = sld [smem:[#allocation2]]
    %v43 = vstv %s42
    %v44 = vmul.f32 %v43, %v39
    %v45 = vadd.f32 %v41, %v44
    %s46 = sld [smem:[#allocation2 + $0x1]]
    %v47 = vstv %s46
    %v48 = vmul.f32 %v47, %v39
    %50 = vrot.lane.b32.xlu0 %v48, 127
    %v51 = vpop.permute.xlu0 %50
    %v53 = vadd.f32 %v45, %v51
    %s54 = sld [smem:[#allocation2 + $0x2]]
    %v55 = vstv %s54
    %v56 = vmul.f32 %v55, %v39
    %58 = vrot.lane.b32.xlu0 %v56, 126
    %v59 = vpop.permute.xlu0 %58
    %v61 = vadd.f32 %v53, %v59
    %s62 = sld [smem:[#allocation2 + $0x3]]
    %v63 = vstv %s62
    %v64 = vmul.f32 %v63, %v39
    %v66 = vrot.slane %v64, 1
    %v68 = vadd.f32 %v61, %v66
    %s69 = sld [smem:[#allocation2 + $0x4]]
    %v70 = vstv %s69
    %v71 = vmul.f32 %v70, %v39
    %v73 = vrot.slane %v71, 1
    %74 = vrot.lane.b32.xlu0 %v73, 127
    %v75 = vpop.permute.xlu0 %74
    %v77 = vadd.f32 %v68, %v75
    %s78 = sld [smem:[#allocation2 + $0x5]]
    %v79 = vstv %s78
    %v80 = vmul.f32 %v79, %v39
    %v82 = vrot.slane %v80, 1
    %83 = vrot.lane.b32.xlu0 %v82, 126
    %v84 = vpop.permute.xlu0 %83
    %v86 = vadd.f32 %v77, %v84
    %s87 = sld [smem:[#allocation2 + $0x6]]
    %v88 = vstv %s87
    %v89 = vmul.f32 %v88, %v39
    %v91 = vrot.slane %v89, 2
    %v93 = vadd.f32 %v86, %v91
    %s94 = sld [smem:[#allocation2 + $0x7]]
    %v95 = vstv %s94
    %v96 = vmul.f32 %v95, %v39
    %v98 = vrot.slane %v96, 2
    %99 = vrot.lane.b32.xlu0 %v98, 127
    %v100 = vpop.permute.xlu0 %99
    %v102 = vadd.f32 %v93, %v100
    %s103 = sld [smem:[#allocation2 + $0x8]]
    %v104 = vstv %s103
    %v105 = vmul.f32 %v104, %v39
    %v107 = vrot.slane %v105, 2
    %108 = vrot.lane.b32.xlu0 %v107, 126
    %v109 = vpop.permute.xlu0 %108
    %v111 = vadd.f32 %v102, %v109
    %s112 = sld [smem:[#allocation4 + $0x1]]
    %v113 = vstv %s112
    %s114 = sld [smem:[#allocation2 + $0x9]]
    %v115 = vstv %s114
    %v116 = vmul.f32 %v115, %v39
    %v117 = vadd.f32 %v113, %v116
    %s118 = sld [smem:[#allocation2 + $0xa]]
    %v119 = vstv %s118
    %v120 = vmul.f32 %v119, %v39
    %122 = vrot.lane.b32.xlu0 %v120, 127
    %v123 = vpop.permute.xlu0 %122
    %v125 = vadd.f32 %v117, %v123
    %s126 = sld [smem:[#allocation2 + $0xb]]
    %v127 = vstv %s126
    %v128 = vmul.f32 %v127, %v39
    %130 = vrot.lane.b32.xlu0 %v128, 126
    %v131 = vpop.permute.xlu0 %130
    %v133 = vadd.f32 %v125, %v131
    %s134 = sld [smem:[#allocation2 + $0xc]]
    %v135 = vstv %s134
    %v136 = vmul.f32 %v135, %v39
    %v138 = vrot.slane %v136, 1
    %v140 = vadd.f32 %v133, %v138
    %s141 = sld [smem:[#allocation2 + $0xd]]
    %v142 = vstv %s141
    %v143 = vmul.f32 %v142, %v39
    %v145 = vrot.slane %v143, 1
    %146 = vrot.lane.b32.xlu0 %v145, 127
    %v147 = vpop.permute.xlu0 %146
    %v149 = vadd.f32 %v140, %v147
    %s150 = sld [smem:[#allocation2 + $0xe]]
    %v151 = vstv %s150
    %v152 = vmul.f32 %v151, %v39
    %v154 = vrot.slane %v152, 1
    %155 = vrot.lane.b32.xlu0 %v154, 126
    %v156 = vpop.permute.xlu0 %155
    %v158 = vadd.f32 %v149, %v156
    %s159 = sld [smem:[#allocation2 + $0xf]]
    %v160 = vstv %s159
    %v161 = vmul.f32 %v160, %v39
    %v163 = vrot.slane %v161, 2
    %v165 = vadd.f32 %v158, %v163
    %s166 = sld [smem:[#allocation2 + $0x10]]
    %v167 = vstv %s166
    %v168 = vmul.f32 %v167, %v39
    %v170 = vrot.slane %v168, 2
    %171 = vrot.lane.b32.xlu0 %v170, 127
    %v172 = vpop.permute.xlu0 %171
    %v174 = vadd.f32 %v165, %v172
    %s175 = sld [smem:[#allocation2 + $0x11]]
    %v176 = vstv %s175
    %v177 = vmul.f32 %v176, %v39
    %v179 = vrot.slane %v177, 2
    %180 = vrot.lane.b32.xlu0 %v179, 126
    %v181 = vpop.permute.xlu0 %180
    %v183 = vadd.f32 %v174, %v181
    %v185 = vrot.slane %v183, 5
    %vm187 = vcmask 1042432
    %v188 = vsel %vm187, %v111, %v185
    %vm189 = vcmask 21504
    %190 = vst.msk [vmem:[%s3] sm:$0x3f] %vm189, %v188
    // Predicated region
    $region22: #{tpu_custom_call.1} parent=1 // pred_check
      _
    $region23: #{tpu_custom_call.1} parent=1 // pred_check_branch
      %192 = sbr.rel (0) target = $region25
    $region24: #{tpu_custom_call.1} parent=1 // pred_region
      _
    $region25: #{tpu_custom_call.1} parent=1 // pred_fallthru
      _
    // Predicated region
    $region26: #{tpu_custom_call.1} parent=1 // pred_check
      _
    $region27: #{tpu_custom_call.1} parent=1 // pred_check_branch
      %194 = sbr.rel (0) target = $region29
    $region28: #{tpu_custom_call.1} parent=1 // pred_region
      _
    $region29: #{tpu_custom_call.1} parent=1 // pred_fallthru
      _
    %195 = vsyncpa [#allocation3], 1
    %196 = vsyncpa [#allocation5], 1

</llo_original>
